<compile_context>
chip_gen: v5e
topology: v5e:2x2
jax: 0.10.0
libtpu: 0.0.40
codegen_flags: <defaults>
</compile_context>

<pallas_src>
import math
from functools import partial

import jax
import jax.numpy as jnp
from jax.experimental import pallas as pl
from jax.experimental.pallas import tpu as pltpu

_LANE = 128
_SUBLANE = 8
_TARGET_BLOCK_BYTES = 4 << 20      # ~4 MiB blocks: near-roofline for a copy
_VMEM_CAP_BYTES = 48 << 20         # stay under v7x's 64 MiB physical VMEM


def _copy_kernel(x_ref, o_ref):
    # Pure element copy of the current (tile_rows, lanes) block.
    o_ref[...] = x_ref[...]


def _choose_tiling(n, itemsize):
    """Pick (rows, lanes, tile_rows) for a flat buffer of n elements.

    Preference order:
      1. sublane-aligned rows (multiple of 8) AND >= 2 grid steps
         (pipeline has >1 stage; v7x megacore gets both cores busy),
      2. sublane-aligned rows,
      3. anything lane-dense (n divisible by 128),
    ties broken by the widest lane dimension (lane-dense stores are the
    biggest measured lever for a bandwidth-bound copy).
    Returns None when n is not a multiple of 128 (caller pads).
    """
    best = None
    for lanes in (32768, 16384, 8192, 4096, 2048, 1024, 512, 256, 128):
        if n % lanes:
            continue
        rows = n // lanes
        if rows % _SUBLANE:
            tile_rows = rows                      # full-extent block (legal)
            score = (0, lanes)
        else:
            tile_rows = min(
                rows,
                max(_SUBLANE,
                    (_TARGET_BLOCK_BYTES // (lanes * itemsize))
                    // _SUBLANE * _SUBLANE))
            # Keep >= 2 grid steps when the row count allows it.
            if tile_rows == rows and rows >= 2 * _SUBLANE:
                tile_rows = rows // 2 // _SUBLANE * _SUBLANE
            while rows % tile_rows:
                tile_rows -= _SUBLANE
            score = (1 + (rows // tile_rows >= 2), lanes)
        if best is None or score > best[0]:
            best = (score, (rows, lanes, tile_rows))
    return None if best is None else best[1]


def _pallas_flat_copy(flat):
    """Copy a flat 1-D buffer through a lane-dense, sublane-full Pallas kernel."""
    n = flat.shape[0]
    itemsize = jnp.dtype(flat.dtype).itemsize
    geom = _choose_tiling(n, itemsize)
    if geom is None:
        # n not a multiple of 128: pad to an (8,128)-aligned slab, copy, slice.
        # Under jit the pad/slice fuse with the surrounding computation.
        pad = (-n) % (_SUBLANE * _LANE)
        return _pallas_flat_copy(jnp.pad(flat, (0, pad)))[:n]

    rows, lanes, tile_rows = geom
    x2d = flat.reshape(rows, lanes)
    block_bytes = tile_rows * lanes * itemsize
    # in + out double-buffered (4x block) plus headroom, capped for v7x.
    vmem_budget = int(min(_VMEM_CAP_BYTES,
                          max(16 << 20, 4 * block_bytes + (2 << 20))))

    y2d = pl.pallas_call(
        _copy_kernel,
        out_shape=jax.ShapeDtypeStruct((rows, lanes), flat.dtype),
        grid_spec=pltpu.PrefetchScalarGridSpec(
            num_scalar_prefetch=0,
            grid=(rows // tile_rows,),
            in_specs=[pl.BlockSpec((tile_rows, lanes), lambda i: (i, 0))],
            out_specs=pl.BlockSpec((tile_rows, lanes), lambda i: (i, 0)),
        ),
        compiler_params=pltpu.CompilerParams(
            dimension_semantics=("parallel",),
            vmem_limit_bytes=vmem_budget,
        ),
    )(x2d)
    return y2d.reshape(n)


@partial(jax.jit, static_argnames=("out_shape",))
def _view_copy(x, out_shape):
    # Single fused computation: reshapes are metadata-only inside jit; the
    # Pallas custom call is the only real HBM read/write pass.
    flat = x.reshape(-1)
    y = _pallas_flat_copy(flat)
    return y.reshape(out_shape)


class View:
    """JAX/Pallas equivalent of the PyTorch View module.

    use_pallas=False returns the metadata-only reshape (the actually optimal,
    zero-cost path); use_pallas=True routes the data through the Pallas copy
    kernel above.
    """

    def __init__(self, *shape, use_pallas: bool = True):
        self.shape = shape
        self.use_pallas = use_pallas

    def _resolve_shape(self, per_batch: int):
        shape = list(self.shape)
        neg = [i for i, s in enumerate(shape) if s == -1]
        if len(neg) > 1:
            raise ValueError("only one dimension can be inferred")
        if neg:
            known = math.prod(s for s in shape if s != -1)
            if known == 0 or per_batch % known != 0:
                raise ValueError(
                    f"cannot view input with {per_batch} elems/batch as {self.shape}")
            shape[neg[0]] = per_batch // known
        if math.prod(shape) != per_batch:
            raise ValueError(
                f"shape {tuple(shape)} is invalid for input with "
                f"{per_batch} elements per batch")
        return tuple(shape)

    def __call__(self, x: jax.Array) -> jax.Array:
        b = x.shape[0]
        per_batch = math.prod(x.shape[1:]) if x.ndim > 1 else 1
        shape = self._resolve_shape(per_batch)
        out_shape = (b, *shape)

        if not self.use_pallas:
            # torch .view() is metadata-only; so is this.
            return x.reshape(out_shape)

        return _view_copy(x, out_shape)


if __name__ == "__main__":
    key = jax.random.PRNGKey(0)
    # Small NCHW-like input: batch=2, channels=4, spatial=16x16.
    x = jax.random.normal(key, (2, 4, 16, 16), dtype=jnp.float32)

    # View(8, 128) -> (2, 8, 128)
    y = jax.block_until_ready(View(8, 128)(x))
    assert y.shape == (2, 8, 128), y.shape
    assert y.dtype == x.dtype
    assert bool(jnp.array_equal(y, x.reshape(2, 8, 128)))

    # -1 inference path: View(-1, 16) -> (2, 64, 16)
    y2 = jax.block_until_ready(View(-1, 16)(x))
    assert y2.shape == (2, 64, 16)
    assert bool(jnp.array_equal(y2, x.reshape(2, 64, 16)))

    # Non-128-divisible element count exercises the padded slab path.
    x3 = jax.random.normal(jax.random.PRNGKey(0), (2, 5, 7), dtype=jnp.float32)
    y3 = jax.block_until_ready(View(-1)(x3))
    assert y3.shape == (2, 35)
    assert bool(jnp.array_equal(y3, x3.reshape(2, 35)))

    # Larger lane-dense case: (2, 64, 256) -> (2, 128, 128), multi-step grid.
    x4 = jax.random.normal(jax.random.PRNGKey(1), (2, 64, 256), dtype=jnp.bfloat16)
    y4 = jax.block_until_ready(View(128, 128)(x4))
    assert y4.shape == (2, 128, 128)
    assert bool(jnp.array_equal(y4, x4.reshape(2, 128, 128)))

    # Metadata-only (zero-cost) path matches the kernel path.
    y5 = jax.block_until_ready(View(8, 128, use_pallas=False)(x))
    assert bool(jnp.array_equal(y5, y))

    print("KERNEL_OK")
</pallas_src>

<mosaic_0001>
module attributes {stable_mosaic.version = 11 : i64} {
  func.func @_copy_kernel(%arg0: i32, %arg1: memref<8x128xf32, #tpu.memory_space<vmem>>, %arg2: memref<8x128xf32, #tpu.memory_space<vmem>>) attributes {dimension_semantics = [#tpu.dimension_semantics<parallel>], iteration_bounds = array<i64: 2>, scalar_prefetch = 0 : i64, scratch_operands = 0 : i64, tpu.core_type = #tpu.core_type<tc>, window_params = [{transform_indices = @transform_0, window_bounds = array<i64: 8, 128>}, {transform_indices = @transform_1, window_bounds = array<i64: 8, 128>}]} {
    %c0 = arith.constant 0 : index
    %c0_0 = arith.constant 0 : index
    %0 = vector.load %arg1[%c0, %c0_0] : memref<8x128xf32, #tpu.memory_space<vmem>>, vector<8x128xf32>
    %c0_1 = arith.constant 0 : index
    %c0_2 = arith.constant 0 : index
    %1 = vector.load %arg2[%c0_1, %c0_2] : memref<8x128xf32, #tpu.memory_space<vmem>>, vector<8x128xf32>
    tpu.vector_store %arg2[%c0_1, %c0_2], %0 {strides = array<i32>} : memref<8x128xf32, #tpu.memory_space<vmem>>, vector<8x128xf32>,
    return
  }
  func.func @transform_0(%arg0: i32) -> (i32, i32) {
    %c0_i32 = arith.constant 0 : i32
    %c0_i32_0 = arith.constant 0 : i32
    return %arg0, %c0_i32 : i32, i32
  }
  func.func @transform_1(%arg0: i32) -> (i32, i32) {
    %c0_i32 = arith.constant 0 : i32
    %c0_i32_0 = arith.constant 0 : i32
    return %arg0, %c0_i32 : i32, i32
  }
}

</mosaic_0001>

<llo_original>
// kernel: _view_copy.1
$region0: #{_view_copy.1}
  #allocation0 [shape = 'u32[]', space=smem, size = 0x4, offset = 0x4, fixed_abs, tag = 'smem constant byte address 0x4 - core index']
  #allocation1 [shape = 'u32[72,128]{1,0:T(1,128)}', space=vmem, size = 0x9000, scoped, tag = 'internal scratch']
  %s0 = inlined_call_operand.vmem [shape: f32[16,128], index: 0, kind: input, shape index: {}]
  %s1 = inlined_call_operand.hbm [shape: f32[16,128], index: 1, kind: output, shape index: {}]
  %s2 = sld [smem:[#allocation0]]
  $region37: #{_view_copy.1} parent=0
    _
  %s4 = ssub.s32 1, %s2
  %s5 = scalar_select 0, %s4, %s2
  $region1: #{_view_copy.1} parent=0
    #allocation2 [shape = 'u8[8192]{0}', space=vmem, size = 0x2000, scoped, tag = 'output window, operand 0']
    #allocation3 [shape = 's32[2]{0}', space=sflag, size = 0x8, scoped, tag = 'scoped memory for _view_copy.1']
    %6 = vsyncpa [#allocation3], 0
    %s7 = scalar_lea.sflag [#allocation3], 1
    %8 = vsyncpa %s7, 0
    loop: start=0, step=1, limit=4
    $region2: #{_view_copy.1} parent=1 // loop_pre_header
      _
    $region3: #{_view_copy.1} parent=1 // loop_header
      %s10 = sphi 0, %s14
      %p11 = scmp.ge.s32.totalorder %s10, 4
      %s20 = sphi 0, %s22
      %s23 = sphi 0, %s20
      %s24 = sphi 0, %s23
      %s40 = sphi 0, %s24
      %s46 = sphi 0, %s48
      %s49 = sphi 0, %s46
      %s50 = sphi 0, %s49
      %s66 = sphi 0, %s50
    $region4: #{_view_copy.1} parent=1 // loop_header_branch
      %13 = sbr.rel (%p11) target = $region8
    $region5: #{_view_copy.1} parent=1 // loop_body
      %s15 = ssub.s32 %s10, 1
      %s16 = ssub.s32 %s10, 2
      %s17 = sadd.s32 %s10, 1
      %s18 = ssub.s32 %s10, %s17
      %p19 = scmp.eq.s32.totalorder %s18, 0
      %s21 = sadd.s32 %s20, 1
      %s22 = scalar_select %p19, %s20, %s21
      %p25 = pneg %p19
      %p26 = scmp.eq.s32.totalorder %s10, 1
      %p27 = por %p25, %p26
      %p28 = scmp.ne.s32.totalorder %s20, %s23
      %p29 = scmp.eq.s32.totalorder %s10, 0
      %p30 = por %p28, %p29
      %p31 = scmp.ne.s32.totalorder %s20, %s23
      %p32 = scmp.eq.s32.totalorder %s15, 1
      %p33 = por %p31, %p32
      %p34 = scmp.ne.s32.totalorder %s23, %s24
      %p35 = scmp.eq.s32.totalorder %s15, 0
      %p36 = por %p34, %p35
      %p37 = scmp.ne.s32.totalorder %s23, %s24
      %p38 = scmp.eq.s32.totalorder %s16, 1
      %p39 = por %p37, %p38
      %p41 = scmp.ne.s32.totalorder %s24, %s40
      %p42 = scmp.eq.s32.totalorder %s16, 0
      %p43 = por %p41, %p42
      %s44 = ssub.s32 %s10, %s17
      %p45 = scmp.eq.s32.totalorder %s44, 0
      %s47 = sadd.s32 %s46, 1
      %s48 = scalar_select %p45, %s46, %s47
      %p51 = pneg %p45
      %p52 = scmp.eq.s32.totalorder %s10, 1
      %p53 = por %p51, %p52
      %p54 = scmp.ne.s32.totalorder %s46, %s49
      %p55 = scmp.eq.s32.totalorder %s10, 0
      %p56 = por %p54, %p55
      %p57 = scmp.ne.s32.totalorder %s46, %s49
      %p58 = scmp.eq.s32.totalorder %s15, 1
      %p59 = por %p57, %p58
      %p60 = scmp.ne.s32.totalorder %s49, %s50
      %p61 = scmp.eq.s32.totalorder %s15, 0
      %p62 = por %p60, %p61
      %p63 = scmp.ne.s32.totalorder %s49, %s50
      %p64 = scmp.eq.s32.totalorder %s16, 1
      %p65 = por %p63, %p64
      %p67 = scmp.ne.s32.totalorder %s50, %s66
      %p68 = scmp.eq.s32.totalorder %s16, 0
      %p69 = por %p67, %p68
      %p70 = scmp.le.s32.totalorder 1, %s10
      %p71 = scmp.lt.s32.totalorder %s10, 3
      %p72 = pnand %p70, %p71
      %p73 = pneg %p72
      // Predicated region
      $region9: #{_view_copy.1} parent=5 // pred_check
        _
      $region10: #{_view_copy.1} parent=5 // pred_check_branch
        %75 = sbr.rel (%p72) target = $region12
      $region11: #{_view_copy.1} parent=5 // pred_region
        %s76 = ssub.s32 %s10, 1
      $region12: #{_view_copy.1} parent=5 // pred_fallthru
        _
      %p77 = scmp.lt.s32.totalorder %s10, 2
      // Predicated region
      $region13: #{_view_copy.1} parent=5 // pred_check
        %p78 = pneg %p77
      $region14: #{_view_copy.1} parent=5 // pred_check_branch
        %80 = sbr.rel (%p78) target = $region16
      $region15: #{_view_copy.1} parent=5 // pred_region
        // Predicated region
        $region17: #{_view_copy.1} parent=15 // pred_check
          %p81 = pneg %p30
        $region18: #{_view_copy.1} parent=15 // pred_check_branch
          %83 = sbr.rel (%p81) target = $region20
        $region19: #{_view_copy.1} parent=15 // pred_region
          %p84 = scmp.lt.s32.totalorder %s10, 1
          %s85 = scalar_select %p84, %s10, 1
          %s86 = smul.addr %s85, 8
          %s87 = scalar_lea.vmem %s0, %s86
        $region20: #{_view_copy.1} parent=15 // pred_fallthru
          _
      $region16: #{_view_copy.1} parent=5 // pred_fallthru
        _
      %p88 = scmp.le.s32.totalorder 1, %s10
      %p89 = scmp.lt.s32.totalorder %s10, 3
      %p90 = pnand %p88, %p89
      %p91 = pneg %p90
      // Predicated region
      $region21: #{_view_copy.1} parent=5 // pred_check
        _
      $region22: #{_view_copy.1} parent=5 // pred_check_branch
        %93 = sbr.rel (%p90) target = $region24
      $region23: #{_view_copy.1} parent=5 // pred_region
        %s94 = ssub.s32 %s10, 1
        %p95 = scmp.lt.s32.totalorder %s15, 1
        %s96 = scalar_select %p95, %s15, 1
        %s97 = smul.addr %s96, 8
        %s98 = scalar_lea.vmem %s0, %s97
        %p99 = pneg %p36
        %p100 = pneg %p33
        %p101 = pneg %p62
        %p102 = pneg %p59
        %s103 = sand.u32 %s49, 1
        %s104 = scalar_lea.sflag [#allocation3], %s103
        %s105 = sand.u32 %s49, 1
        %s106 = smul.addr %s105, 8
        %s107 = scalar_lea.vmem [#allocation2], %s106
        %p108 = scmp.lt.s32.totalorder %s15, 1
        %s109 = scalar_select %p108, %s15, 1
        %s110 = smul.addr %s109, 8
        %s111 = scalar_lea.vmem %s0, %s110
        %v112 = vld [vmem:[%s111] sm:$0xff]
        %113 = vst [vmem:[%s107] sm:$0xff] %v112
        %s114 = sand.u32 %s49, 1
        %s115 = scalar_lea.sflag [#allocation3], %s114
        %s116 = sand.u32 %s49, 1
        %s117 = smul.addr %s116, 8
        %s118 = scalar_lea.vmem [#allocation2], %s117
        // Predicated region
        $region25: #{_view_copy.1} parent=23 // pred_check
          %p119 = pneg %p59
        $region26: #{_view_copy.1} parent=23 // pred_check_branch
          %121 = sbr.rel (%p119) target = $region28
        $region27: #{_view_copy.1} parent=23 // pred_region
          %123 = vsyncadd %s115, 0
          %s124 = smul.addr %s15, 8
          %s125 = scalar_lea.hbm %s1, %s124
          %s127 = sshll.u32 %s118, 4
          %s128 = int_to_ptr.vmem [resolvable:$true] %s127
          %s129 = sshll.u32 %s125, 4
          %s130 = int_to_ptr.hbm [resolvable:$true] %s129
          %132 = dma.vmem_to_hbm [thread:$0]  %s128, 128, %s130, %s115
        $region28: #{_view_copy.1} parent=23 // pred_fallthru
          _
      $region24: #{_view_copy.1} parent=5 // pred_fallthru
        _
      %p133 = scmp.le.s32.totalorder 2, %s10
      // Predicated region
      $region29: #{_view_copy.1} parent=5 // pred_check
        %p134 = pneg %p133
      $region30: #{_view_copy.1} parent=5 // pred_check_branch
        %136 = sbr.rel (%p134) target = $region32
      $region31: #{_view_copy.1} parent=5 // pred_region
        %s137 = ssub.s32 %s10, 2
        // Predicated region
        $region33: #{_view_copy.1} parent=31 // pred_check
          %p138 = pneg %p65
        $region34: #{_view_copy.1} parent=31 // pred_check_branch
          %140 = sbr.rel (%p138) target = $region36
        $region35: #{_view_copy.1} parent=31 // pred_region
          %s141 = sand.u32 %s50, 1
          %s142 = scalar_lea.sflag [#allocation3], %s141
          %s143 = sand.u32 %s50, 1
          %s144 = smul.addr %s143, 8
          %s145 = scalar_lea.vmem [#allocation2], %s144
          %147 = dma.done %s142, 128
        $region36: #{_view_copy.1} parent=31 // pred_fallthru
          _
      $region32: #{_view_copy.1} parent=5 // pred_fallthru
        _
    $region6: #{_view_copy.1} parent=1 // loop_footer
      %s14 = sadd.s32 1, %s10
    $region7: #{_view_copy.1} parent=1 // loop_footer_branch
      %9 = sbr.rel target = $region3
    $region8: #{_view_copy.1} parent=1 // loop_exit
      _
    %148 = vsyncpa [#allocation3], 1
    %s149 = scalar_lea.sflag [#allocation3], 1
    %150 = vsyncpa %s149, 1

</llo_original>
